<compile_context>
chip_gen: v6e
topology: v6e:2x2x1
jax: 0.10.0
libtpu: 0.0.40
codegen_flags: <defaults>
</compile_context>

<pallas_src>
import functools

import jax
import jax.numpy as jnp
import numpy as np
from jax.experimental import pallas as pl
from jax.experimental.pallas import tpu as pltpu

_LANE = 128
_PAD_N = 256                              # MXU friendly: 2x128 (v5e) / 1x256 (v6e, v7x)
_VMEM_LIMIT_BYTES = 40 * 1024 * 1024      # under v7x's 64 MiB physical VMEM, fine on v5e/v6e
_RESIDENT_VMEM_BUDGET = 24 * 1024 * 1024  # P-resident path must fit this (v7x-safe)


def _round_up(v, m):
    return ((v + m - 1) // m) * m


def _largest_tile(n, candidates):
    for c in candidates:
        if n % c == 0:
            return c
    return n


# ----------------------------------------------------------------------------
# Streaming path: one tiled, pipelined matmul per diffusion layer.
# ----------------------------------------------------------------------------
def _stream_matmul_kernel(p_ref, x_ref, o_ref, acc_ref):
    """One (tm, tk) @ (tk, Fp) MXU step of out = P @ x with an f32 VMEM accumulator."""
    @pl.when(pl.program_id(1) == 0)
    def _init():
        acc_ref[...] = jnp.zeros_like(acc_ref)

    acc_ref[...] += jnp.dot(p_ref[...], x_ref[...],
                            preferred_element_type=jnp.float32)

    @pl.when(pl.program_id(1) == pl.num_programs(1) - 1)
    def _finalize():
        o_ref[...] = acc_ref[...].astype(o_ref.dtype)


def _propagate_streaming(p_q, x_q):
    """out = P @ x, P streamed from HBM in (tm, tk) tiles (double-buffered)."""
    n_pad = p_q.shape[0]
    f_pad = x_q.shape[1]
    tm = _largest_tile(n_pad, (512, 256, 128))
    tk = _largest_tile(n_pad, (1024, 512, 256, 128))
    isz = p_q.dtype.itemsize
    cost = pl.CostEstimate(
        flops=2 * n_pad * n_pad * f_pad,
        transcendentals=0,
        bytes_accessed=(n_pad * n_pad * isz          # P read once
                        + n_pad * f_pad * isz        # x read
                        + n_pad * f_pad * 4))        # f32 output written
    return pl.pallas_call(
        _stream_matmul_kernel,
        out_shape=jax.ShapeDtypeStruct((n_pad, f_pad), jnp.float32),
        grid_spec=pltpu.PrefetchScalarGridSpec(
            num_scalar_prefetch=0,
            grid=(n_pad // tm, n_pad // tk),
            in_specs=[pl.BlockSpec((tm, tk), lambda i, k: (i, k)),
                      pl.BlockSpec((tk, f_pad), lambda i, k: (k, 0))],
            out_specs=pl.BlockSpec((tm, f_pad), lambda i, k: (i, 0)),
            scratch_shapes=[pltpu.VMEM((tm, f_pad), jnp.float32)]),
        compiler_params=pltpu.CompilerParams(
            # row tiles are independent -> shard across v7x's 2 TensorCores;
            # K is the reduction axis (accumulator), kept last and 'arbitrary'.
            dimension_semantics=("parallel", "arbitrary"),
            vmem_limit_bytes=_VMEM_LIMIT_BYTES),
        cost_estimate=cost,
    )(p_q, x_q)


# ----------------------------------------------------------------------------
# Resident path: all L layers in one pallas_call, P held in VMEM across layers.
# ----------------------------------------------------------------------------
def _make_resident_kernel(n_pad, f_pad, tm, tk):
    k_tiles = n_pad // tk
    m_tiles = n_pad // tm

    def kernel(p_ref, x0_ref, out_ref, xbuf_ref):
        l = pl.program_id(0)   # layer index
        i = pl.program_id(1)   # row-tile index

        # First grid step only: stage x0 into slot 0 of the ping-pong buffer
        # (chunked, lane-dense copies keep vreg pressure bounded).
        @pl.when(jnp.logical_and(l == 0, i == 0))
        def _stage_x0():
            for r in range(m_tiles):
                xbuf_ref[r * tm:(r + 1) * tm, :] = x0_ref[r * tm:(r + 1) * tm, :]

        # Ping-pong slots inside the flattened (2*N, F) scratch.
        src = (l % 2) * n_pad          # features of layer l
        dst = ((l + 1) % 2) * n_pad    # features of layer l + 1
        row = pl.multiple_of(i * tm, tm)

        # K reduction over (tm, tk) slices of the VMEM-resident P; P is never
        # loaded wholesale into vregs.
        acc = jnp.zeros((tm, f_pad), jnp.float32)
        for kk in range(k_tiles):
            col = kk * tk
            p_tile = p_ref[pl.ds(row, tm), pl.ds(col, tk)]
            x_tile = xbuf_ref[pl.ds(pl.multiple_of(src + col, _LANE), tk), :]
            acc = acc + jnp.dot(p_tile, x_tile, preferred_element_type=jnp.float32)

        xbuf_ref[pl.ds(pl.multiple_of(dst + row, _LANE), tm), :] = (
            acc.astype(xbuf_ref.dtype))
        out_ref[0] = acc

    return kernel


def _propagate_resident(p_q, x_q, num_layers):
    """Stack [x_1, ..., x_L] from one kernel; P is DMA'd to VMEM exactly once."""
    n_pad = p_q.shape[0]
    f_pad = x_q.shape[1]
    tm = 128
    tk = _largest_tile(n_pad, (512, 256, 128))
    isz = p_q.dtype.itemsize
    cost = pl.CostEstimate(
        flops=2 * num_layers * n_pad * n_pad * f_pad,
        transcendentals=0,
        bytes_accessed=(n_pad * n_pad * isz                 # P read once (resident)
                        + n_pad * f_pad * isz               # x0
                        + num_layers * n_pad * f_pad * 4))  # f32 per-layer outputs
    kernel = _make_resident_kernel(n_pad, f_pad, tm, tk)
    return pl.pallas_call(
        kernel,
        out_shape=jax.ShapeDtypeStruct((num_layers, n_pad, f_pad), jnp.float32),
        grid_spec=pltpu.PrefetchScalarGridSpec(
            num_scalar_prefetch=0,
            grid=(num_layers, n_pad // tm),
            in_specs=[
                # Constant index maps -> single DMA, block stays resident.
                pl.BlockSpec((n_pad, n_pad), lambda l, i: (0, 0)),
                pl.BlockSpec((n_pad, f_pad), lambda l, i: (0, 0)),
            ],
            out_specs=pl.BlockSpec((1, tm, f_pad), lambda l, i: (l, i, 0)),
            scratch_shapes=[pltpu.VMEM((2 * n_pad, f_pad), p_q.dtype)]),
        compiler_params=pltpu.CompilerParams(
            # The layer axis carries a sequential dependency through the x
            # ping-pong scratch, so both axes must stay 'arbitrary' here.
            dimension_semantics=("arbitrary", "arbitrary"),
            vmem_limit_bytes=_VMEM_LIMIT_BYTES),
        cost_estimate=cost,
    )(p_q, x_q)


# ----------------------------------------------------------------------------
# Graph glue + forward wrapper.
# ----------------------------------------------------------------------------
def build_propagation_matrix(num_nodes, edge_index, edge_attr):
    """Dense P = D^{-1/2} (A_w + I) D^{-1/2} from (edge_index, edge_attr)."""
    row, col = edge_index[0], edge_index[1]
    a = jnp.zeros((num_nodes, num_nodes), jnp.float32)
    a = a.at[row, col].add(edge_attr.astype(jnp.float32))
    a = a + jnp.eye(num_nodes, dtype=jnp.float32)  # self-loops with weight 1
    deg = jnp.sum(a, axis=1)
    d_inv_sqrt = jax.lax.rsqrt(jnp.maximum(deg, 1e-12))
    return d_inv_sqrt[:, None] * a * d_inv_sqrt[None, :]


@functools.partial(
    jax.jit,
    static_argnames=("num_hidden_layers", "final_node_embedding",
                     "mxu_dtype", "force_streaming"))
def diffusion_forward(x, edge_index, edge_attr, num_hidden_layers,
                      final_node_embedding="final", mxu_dtype=jnp.bfloat16,
                      force_streaming=False):
    if final_node_embedding not in ("final", "avg", "concat"):
        raise NotImplementedError()

    n, f = x.shape
    num_layers = int(num_hidden_layers)
    n_pad = _round_up(max(n, 1), _PAD_N)
    f_pad = _round_up(max(f, 1), _LANE)

    p = build_propagation_matrix(n, edge_index, edge_attr)             # (n, n) f32
    p_pad = jnp.zeros((n_pad, n_pad), jnp.float32).at[:n, :n].set(p)
    x_pad = jnp.zeros((n_pad, f_pad), jnp.float32).at[:n, :f].set(x.astype(jnp.float32))
    p_q = p_pad.astype(mxu_dtype)                                      # MXU input dtype

    # Pick the P-resident fused kernel only if its VMEM footprint (with
    # pipeline double-buffering) fits a v7x-safe budget; otherwise stream tiles.
    isz = jnp.dtype(mxu_dtype).itemsize
    resident_bytes = (2 * n_pad * n_pad * isz      # P block (double-buffered)
                      + 2 * n_pad * f_pad * isz    # x0 block (double-buffered)
                      + 2 * n_pad * f_pad * isz    # ping-pong feature scratch
                      + 2 * 128 * f_pad * 4)       # output block (double-buffered)
    use_resident = (num_layers >= 1 and not force_streaming
                    and resident_bytes <= _RESIDENT_VMEM_BUDGET)

    outs = [x_pad]                                 # [x_0, x_1, ..., x_L], f32, padded
    if num_layers >= 1:
        if use_resident:
            stack = _propagate_resident(p_q, x_pad.astype(mxu_dtype), num_layers)
            outs += [stack[l] for l in range(num_layers)]
        else:
            h = x_pad
            for _ in range(num_layers):
                h = _propagate_streaming(p_q, h.astype(mxu_dtype))
                outs.append(h)

    # Cheap combine + un-pad in plain JAX (O(L*N*F) elementwise work).
    if final_node_embedding == "final":
        out = outs[-1][:n, :f]
    elif final_node_embedding == "avg":
        out = jnp.mean(jnp.stack(outs, axis=0), axis=0)[:n, :f]
    else:  # 'concat'
        out = jnp.concatenate([o[:n, :f] for o in outs], axis=1)
    return out.astype(x.dtype)


def _reference_forward(x, p, num_layers, mode, compute_dtype=jnp.float32):
    """Pure-JAX reference mirroring the PyTorch forward (matched MXU input dtype)."""
    pq = p.astype(compute_dtype)
    h = x.astype(jnp.float32)
    outs = [h]
    for _ in range(num_layers):
        h = jnp.dot(pq, h.astype(compute_dtype), preferred_element_type=jnp.float32)
        outs.append(h)
    if mode == "final":
        return h
    if mode == "avg":
        return jnp.mean(jnp.stack(outs), axis=0)
    return jnp.concatenate(outs, axis=1)


if __name__ == "__main__":
    key = jax.random.PRNGKey(0)
    k_x, k_src, k_dst, k_w = jax.random.split(key, 4)

    num_nodes = 16          # N
    num_feat = 32           # F (node-feature dim)
    num_undirected = 24     # undirected edges -> 48 directed
    num_hidden_layers = 3   # number of Diffusion_layer steps

    x = jax.random.normal(k_x, (num_nodes, num_feat), dtype=jnp.float32)

    src = jax.random.randint(k_src, (num_undirected,), 0, num_nodes)
    dst = jax.random.randint(k_dst, (num_undirected,), 0, num_nodes)
    edge_index = jnp.stack([jnp.concatenate([src, dst]),
                            jnp.concatenate([dst, src])]).astype(jnp.int32)
    w = jax.random.uniform(k_w, (num_undirected,), minval=0.5, maxval=1.5)
    edge_attr = jnp.concatenate([w, w]).astype(jnp.float32)

    p_dense = build_propagation_matrix(num_nodes, edge_index, edge_attr)

    ok = True
    for mode in ("final", "avg", "concat"):
        # Matched-precision (bf16 MXU inputs, f32 accumulation) reference; the
        # tolerance also covers rare bf16 rounding-boundary flips between the
        # kernel and the XLA reference on the chained matmuls.
        ref = np.asarray(
            _reference_forward(x, p_dense, num_hidden_layers, mode,
                               compute_dtype=jnp.bfloat16), dtype=np.float32)
        exp_cols = (num_feat * (num_hidden_layers + 1)
                    if mode == "concat" else num_feat)
        expected_shape = (num_nodes, exp_cols)

        for force_streaming in (False, True):   # exercise both kernel paths
            out = diffusion_forward(x, edge_index, edge_attr, num_hidden_layers,
                                    final_node_embedding=mode,
                                    force_streaming=force_streaming)
            out = jax.block_until_ready(out)
            out_np = np.asarray(out, dtype=np.float32)
            if out.shape != expected_shape:
                ok = False
            if not np.allclose(out_np, ref, rtol=5e-2, atol=5e-2):
                ok = False

    if ok:
        print("KERNEL_OK")
</pallas_src>

<mosaic_0001>
module attributes {stable_mosaic.version = 11 : i64} {
  func.func private @main(%arg0: i32) attributes {dimension_semantics = [#tpu.dimension_semantics<core_parallel>], iteration_bounds = array<i64: 2>, tpu.core_type = #tpu.core_type<sc_scalar_subcore>, window_params = []} {
    return
  }
}

module attributes {stable_mosaic.version = 11 : i64} {
  func.func private @main(%arg0: i32) attributes {dimension_semantics = [#tpu.dimension_semantics<core_parallel>], iteration_bounds = array<i64: 2>, tpu.core_type = #tpu.core_type<sc_scalar_subcore>, window_params = []} {
    return
  }
}

module attributes {stable_mosaic.version = 11 : i64} {
  func.func @kernel(%arg0: i32, %arg1: i32, %arg2: memref<256x256xbf16, #tpu.memory_space<vmem>>, %arg3: memref<256x128xbf16, #tpu.memory_space<vmem>>, %arg4: memref<1x128x128xf32, #tpu.memory_space<vmem>>, %arg5: memref<512x128xbf16, #tpu.memory_space<vmem>>) attributes {dimension_semantics = [#tpu.dimension_semantics<arbitrary>, #tpu.dimension_semantics<arbitrary>], iteration_bounds = array<i64: 3, 2>, scalar_prefetch = 0 : i64, scratch_operands = 1 : i64, tpu.core_type = #tpu.core_type<tc>, window_params = [{pipeline_mode = #tpu.pipeline_mode<synchronous>, transform_indices = @transform_0, window_bounds = array<i64: 256, 256>}, {pipeline_mode = #tpu.pipeline_mode<synchronous>, transform_indices = @transform_1, window_bounds = array<i64: 256, 128>}, {transform_indices = @transform_2, window_bounds = array<i64: 1, 128, 128>}]} {
    %c0_i32 = arith.constant 0 : i32
    %0 = arith.cmpi eq, %arg0, %c0_i32 : i32
    %c0_i32_0 = arith.constant 0 : i32
    %1 = arith.cmpi eq, %arg1, %c0_i32_0 : i32
    %2 = arith.andi %0, %1 : i1
    %3 = arith.extui %2 : i1 to i32
    %c0_i32_1 = arith.constant 0 : i32
    %4 = arith.cmpi ne, %3, %c0_i32_1 : i32
    scf.if %4 {
      %c0_21 = arith.constant 0 : index
      %c0_22 = arith.constant 0 : index
      %47 = vector.load %arg3[%c0_21, %c0_22] : memref<256x128xbf16, #tpu.memory_space<vmem>>, vector<128x128xbf16>
      %c0_23 = arith.constant 0 : index
      %c0_24 = arith.constant 0 : index
      %48 = vector.load %arg5[%c0_23, %c0_24] : memref<512x128xbf16, #tpu.memory_space<vmem>>, vector<128x128xbf16>
      tpu.vector_store %arg5[%c0_23, %c0_24], %47 {strides = array<i32>} : memref<512x128xbf16, #tpu.memory_space<vmem>>, vector<128x128xbf16>,
      %c128 = arith.constant 128 : index
      %c0_25 = arith.constant 0 : index
      %49 = vector.load %arg3[%c128, %c0_25] : memref<256x128xbf16, #tpu.memory_space<vmem>>, vector<128x128xbf16>
      %c128_26 = arith.constant 128 : index
      %c0_27 = arith.constant 0 : index
      %50 = vector.load %arg5[%c128_26, %c0_27] : memref<512x128xbf16, #tpu.memory_space<vmem>>, vector<128x128xbf16>
      tpu.vector_store %arg5[%c128_26, %c0_27], %49 {strides = array<i32>} : memref<512x128xbf16, #tpu.memory_space<vmem>>, vector<128x128xbf16>,
    } else {
    }
    %c2_i32 = arith.constant 2 : i32
    %c0_i32_2 = arith.constant 0 : i32
    %5 = arith.cmpi eq, %c2_i32, %c0_i32_2 : i32
    %c1_i32 = arith.constant 1 : i32
    %6 = arith.select %5, %c1_i32, %c2_i32 : i32
    %7 = arith.remsi %arg0, %6 : i32
    %c0_i32_3 = arith.constant 0 : i32
    %8 = arith.cmpi ne, %7, %c0_i32_3 : i32
    %c0_i32_4 = arith.constant 0 : i32
    %9 = arith.cmpi slt, %7, %c0_i32_4 : i32
    %c0_i32_5 = arith.constant 0 : i32
    %10 = arith.cmpi slt, %6, %c0_i32_5 : i32
    %11 = arith.xori %9, %10 : i1
    %12 = arith.andi %11, %8 : i1
    %13 = arith.addi %7, %6 : i32
    %14 = arith.select %12, %13, %7 : i32
    %c256_i32 = arith.constant 256 : i32
    %15 = arith.muli %14, %c256_i32 : i32
    %c1_i32_6 = arith.constant 1 : i32
    %16 = arith.addi %arg0, %c1_i32_6 : i32
    %c2_i32_7 = arith.constant 2 : i32
    %c0_i32_8 = arith.constant 0 : i32
    %17 = arith.cmpi eq, %c2_i32_7, %c0_i32_8 : i32
    %c1_i32_9 = arith.constant 1 : i32
    %18 = arith.select %17, %c1_i32_9, %c2_i32_7 : i32
    %19 = arith.remsi %16, %18 : i32
    %c0_i32_10 = arith.constant 0 : i32
    %20 = arith.cmpi ne, %19, %c0_i32_10 : i32
    %c0_i32_11 = arith.constant 0 : i32
    %21 = arith.cmpi slt, %19, %c0_i32_11 : i32
    %c0_i32_12 = arith.constant 0 : i32
    %22 = arith.cmpi slt, %18, %c0_i32_12 : i32
    %23 = arith.xori %21, %22 : i1
    %24 = arith.andi %23, %20 : i1
    %25 = arith.addi %19, %18 : i32
    %26 = arith.select %24, %25, %19 : i32
    %c256_i32_13 = arith.constant 256 : i32
    %27 = arith.muli %26, %c256_i32_13 : i32
    %c128_i32 = arith.constant 128 : i32
    %28 = arith.muli %arg1, %c128_i32 : i32
    %29 = tpu.assume_multiple %28, 128 : i32
    %cst = arith.constant 0.000000e+00 : f32
    %30 = vector.broadcast %cst : f32 to vector<128x128xf32>
    %31 = arith.index_cast %29 : i32 to index
    %c0 = arith.constant 0 : index
    %32 = vector.load %arg2[%31, %c0] : memref<256x256xbf16, #tpu.memory_space<vmem>>, vector<128x256xbf16>
    %c0_i32_14 = arith.constant 0 : i32
    %33 = arith.addi %15, %c0_i32_14 : i32
    %34 = tpu.assume_multiple %33, 128 : i32
    %35 = arith.index_cast %34 : i32 to index
    %c0_15 = arith.constant 0 : index
    %36 = vector.load %arg5[%35, %c0_15] : memref<512x128xbf16, #tpu.memory_space<vmem>>, vector<256x128xbf16>
    %cst_16 = arith.constant dense<0.000000e+00> : vector<128x128xf32>
    %37 = tpu.matmul %32, %36, %cst_16 {dimension_numbers = #tpu.dot_dimension_numbers<[1], [0], [0], [1], [0, 0, 1, 1], [], []>} : vector<128x256xbf16>, vector<256x128xbf16>, vector<128x128xf32> -> vector<128x128xf32>
    %38 = arith.addf %30, %37 : vector<128x128xf32>
    %39 = arith.truncf %38 : vector<128x128xf32> to vector<128x128xbf16>
    %40 = arith.addi %27, %29 : i32
    %41 = tpu.assume_multiple %40, 128 : i32
    %42 = arith.index_cast %41 : i32 to index
    %c0_17 = arith.constant 0 : index
    %43 = vector.load %arg5[%42, %c0_17] : memref<512x128xbf16, #tpu.memory_space<vmem>>, vector<128x128xbf16>
    tpu.vector_store %arg5[%42, %c0_17], %39 {strides = array<i32>} : memref<512x128xbf16, #tpu.memory_space<vmem>>, vector<128x128xbf16>,
    %c0_18 = arith.constant 0 : index
    %c0_19 = arith.constant 0 : index
    %c0_20 = arith.constant 0 : index
    %44 = vector.load %arg4[%c0_18, %c0_19, %c0_20] : memref<1x128x128xf32, #tpu.memory_space<vmem>>, vector<1x128x128xf32>
    %45 = vector.shape_cast %44 : vector<1x128x128xf32> to vector<128x128xf32>
    %46 = vector.shape_cast %38 : vector<128x128xf32> to vector<1x128x128xf32>
    tpu.vector_store %arg4[%c0_18, %c0_19, %c0_20], %46 {strides = array<i32>} : memref<1x128x128xf32, #tpu.memory_space<vmem>>, vector<1x128x128xf32>,
    return
  }
  func.func @transform_0(%arg0: i32, %arg1: i32) -> (i32, i32) {
    %c0_i32 = arith.constant 0 : i32
    %c0_i32_0 = arith.constant 0 : i32
    %c0_i32_1 = arith.constant 0 : i32
    return %c0_i32, %c0_i32_0 : i32, i32
  }
  func.func @transform_1(%arg0: i32, %arg1: i32) -> (i32, i32) {
    %c0_i32 = arith.constant 0 : i32
    %c0_i32_0 = arith.constant 0 : i32
    %c0_i32_1 = arith.constant 0 : i32
    return %c0_i32, %c0_i32_0 : i32, i32
  }
  func.func @transform_2(%arg0: i32, %arg1: i32) -> (i32, i32, i32) {
    %c0_i32 = arith.constant 0 : i32
    %c0_i32_0 = arith.constant 0 : i32
    return %arg0, %arg1, %c0_i32 : i32, i32, i32
  }
}

</mosaic_0001>

<llo_original>
// kernel: diffusion_forward.1
$region0: #{diffusion_forward.1}
  #allocation0 [shape = 'u32[]', space=smem, size = 0x4, offset = 0x4, fixed_abs, tag = 'smem constant byte address 0x4 - core index']
  #allocation1 [shape = 'u32[144,128]{1,0:T(1,128)}', space=vmem, size = 0x12000, scoped, tag = 'internal scratch']
  #allocation2 [shape = 'bf16[512,128]{1,0:T(8,128)(2,1)}', space=vmem, size = 0x20000, scoped, tag = 'scratch operand']
  %s0 = inlined_call_operand.vmem [shape: bf16[256,256], index: 0, kind: input, shape index: {}]
  %s1 = inlined_call_operand.vmem [shape: bf16[256,128], index: 1, kind: input, shape index: {}]
  %s2 = inlined_call_operand.vmem [shape: f32[3,256,128], index: 2, kind: output, shape index: {}]
  %s3 = sld [smem:[#allocation0]]
  $region45: #{diffusion_forward.1} parent=0
    _
  %s5 = ssub.s32 1, %s3
  %s6 = scalar_select 0, %s5, %s3
  loop: start=0, step=1, limit=8
  $region2: #{diffusion_forward.1} parent=0 // loop_pre_header
    _
  $region3: #{diffusion_forward.1} parent=0 // loop_header
    %s8 = sphi 0, %s12
    %p9 = scmp.ge.s32.totalorder %s8, 8
    %s15 = sphi 0, %s27
    %s16 = sphi 0, %s23
    %s17 = sphi 0, %s15
    %s18 = sphi 0, %s16
    %s19 = sphi 0, %s17
    %s20 = sphi 0, %s18
    %s28 = sphi 0, %s28
    %s30 = sphi 0, %s28
    %s31 = sphi 0, %s30
    %s45 = sphi 0, %s31
    %s49 = sphi 0, %s49
    %s51 = sphi 0, %s49
    %s52 = sphi 0, %s51
    %s66 = sphi 0, %s52
    %s74 = sphi 0, %s76
    %s77 = sphi 0, %s74
    %s78 = sphi 0, %s77
    %s94 = sphi 0, %s78
  $region4: #{diffusion_forward.1} parent=0 // loop_header_branch
    %11 = sbr.rel (%p9) target = $region8
  $region5: #{diffusion_forward.1} parent=0 // loop_body
    %s13 = ssub.s32 %s8, 1
    %s14 = ssub.s32 %s8, 2
    %s21 = sadd.s32 1, %s16
    %p22 = scmp.ge.s32.totalorder %s21, 2
    %s23 = scalar_select %p22, 0, %s21
    %s24 = sadd.s32 1, %s15
    %s25 = scalar_select %p22, %s24, %s15
    %p26 = scmp.ge.s32.totalorder %s25, 3
    %s27 = scalar_select %p26, 0, %s25
    %s29 = sadd.s32 %s28, 1
    %p32 = scmp.eq.s32.totalorder %s8, 5
    %p33 = scmp.ne.s32.totalorder %s28, %s30
    %p34 = scmp.eq.s32.totalorder %s8, 0
    %p35 = por %p33, %p34
    %p36 = scmp.ne.s32.totalorder %s28, %s30
    %p37 = scmp.eq.s32.totalorder %s13, 5
    %p38 = por %p36, %p37
    %p39 = scmp.ne.s32.totalorder %s30, %s31
    %p40 = scmp.eq.s32.totalorder %s13, 0
    %p41 = por %p39, %p40
    %p42 = scmp.ne.s32.totalorder %s30, %s31
    %p43 = scmp.eq.s32.totalorder %s14, 5
    %p44 = por %p42, %p43
    %p46 = scmp.ne.s32.totalorder %s31, %s45
    %p47 = scmp.eq.s32.totalorder %s14, 0
    %p48 = por %p46, %p47
    %s50 = sadd.s32 %s49, 1
    %p53 = scmp.eq.s32.totalorder %s8, 5
    %p54 = scmp.ne.s32.totalorder %s49, %s51
    %p55 = scmp.eq.s32.totalorder %s8, 0
    %p56 = por %p54, %p55
    %p57 = scmp.ne.s32.totalorder %s49, %s51
    %p58 = scmp.eq.s32.totalorder %s13, 5
    %p59 = por %p57, %p58
    %p60 = scmp.ne.s32.totalorder %s51, %s52
    %p61 = scmp.eq.s32.totalorder %s13, 0
    %p62 = por %p60, %p61
    %p63 = scmp.ne.s32.totalorder %s51, %s52
    %p64 = scmp.eq.s32.totalorder %s14, 5
    %p65 = por %p63, %p64
    %p67 = scmp.ne.s32.totalorder %s52, %s66
    %p68 = scmp.eq.s32.totalorder %s14, 0
    %p69 = por %p67, %p68
    %s70 = ssub.s32 %s15, %s27
    %s71 = ssub.s32 %s16, %s23
    %s72 = sor.u32 %s70, %s71
    %p73 = scmp.eq.s32.totalorder %s72, 0
    %s75 = sadd.s32 %s74, 1
    %s76 = scalar_select %p73, %s74, %s75
    %p79 = pneg %p73
    %p80 = scmp.eq.s32.totalorder %s8, 5
    %p81 = por %p79, %p80
    %p82 = scmp.ne.s32.totalorder %s74, %s77
    %p83 = scmp.eq.s32.totalorder %s8, 0
    %p84 = por %p82, %p83
    %p85 = scmp.ne.s32.totalorder %s74, %s77
    %p86 = scmp.eq.s32.totalorder %s13, 5
    %p87 = por %p85, %p86
    %p88 = scmp.ne.s32.totalorder %s77, %s78
    %p89 = scmp.eq.s32.totalorder %s13, 0
    %p90 = por %p88, %p89
    %p91 = scmp.ne.s32.totalorder %s77, %s78
    %p92 = scmp.eq.s32.totalorder %s14, 5
    %p93 = por %p91, %p92
    %p95 = scmp.ne.s32.totalorder %s78, %s94
    %p96 = scmp.eq.s32.totalorder %s14, 0
    %p97 = por %p95, %p96
    %p98 = scmp.le.s32.totalorder 1, %s8
    %p99 = scmp.lt.s32.totalorder %s8, 7
    %p100 = pnand %p98, %p99
    %p101 = pneg %p100
    // Predicated region
    $region9: #{diffusion_forward.1} parent=5 // pred_check
      _
    $region10: #{diffusion_forward.1} parent=5 // pred_check_branch
      %103 = sbr.rel (%p100) target = $region12
    $region11: #{diffusion_forward.1} parent=5 // pred_region
      %s104 = ssub.s32 %s8, 1
      // Predicated region
      $region13: #{diffusion_forward.1} parent=11 // pred_check
        %p105 = pneg %p41
      $region14: #{diffusion_forward.1} parent=11 // pred_check_branch
        %107 = sbr.rel (%p105) target = $region16
      $region15: #{diffusion_forward.1} parent=11 // pred_region
        _
      $region16: #{diffusion_forward.1} parent=11 // pred_fallthru
        _
      // Predicated region
      $region17: #{diffusion_forward.1} parent=11 // pred_check
        %p108 = pneg %p62
      $region18: #{diffusion_forward.1} parent=11 // pred_check_branch
        %110 = sbr.rel (%p108) target = $region20
      $region19: #{diffusion_forward.1} parent=11 // pred_region
        _
      $region20: #{diffusion_forward.1} parent=11 // pred_fallthru
        _
    $region12: #{diffusion_forward.1} parent=5 // pred_fallthru
      _
    %p111 = scmp.lt.s32.totalorder %s8, 6
    // Predicated region
    $region21: #{diffusion_forward.1} parent=5 // pred_check
      %p112 = pneg %p111
    $region22: #{diffusion_forward.1} parent=5 // pred_check_branch
      %114 = sbr.rel (%p112) target = $region24
    $region23: #{diffusion_forward.1} parent=5 // pred_region
      _
    $region24: #{diffusion_forward.1} parent=5 // pred_fallthru
      _
    %p115 = scmp.le.s32.totalorder 1, %s8
    %p116 = scmp.lt.s32.totalorder %s8, 7
    %p117 = pnand %p115, %p116
    %p118 = pneg %p117
    // Predicated region
    $region25: #{diffusion_forward.1} parent=5 // pred_check
      _
    $region26: #{diffusion_forward.1} parent=5 // pred_check_branch
      %120 = sbr.rel (%p117) target = $region28
    $region27: #{diffusion_forward.1} parent=5 // pred_region
      %s121 = ssub.s32 %s8, 1
      %p122 = pneg %p41
      %p123 = pneg %p38
      %p124 = pneg %p62
      %p125 = pneg %p59
      %p126 = pneg %p90
      %p127 = pneg %p87
      %s128 = smul.u32 16, %s18
      %p129 = scmp.lt.s32.totalorder %s17, 2
      %s130 = scalar_select %p129, %s17, 2
      %p131 = scmp.lt.s32.totalorder %s128, 31
      %s132 = scalar_select %p131, %s128, 31
      %s133 = smul.addr %s130, 32
      %s134 = sadd.s32 %s132, %s133
      %s135 = smul.addr %s134, 8
      %s136 = scalar_lea.vmem %s2, %s135
      %s137 = smul.u32 16, %s18
      %p138 = scmp.lt.s32.totalorder %s17, 2
      %s139 = scalar_select %p138, %s17, 2
      %p140 = scmp.lt.s32.totalorder %s137, 31
      %s141 = scalar_select %p140, %s137, 31
      %s142 = smul.addr %s139, 32
      %s143 = sadd.s32 %s141, %s142
      %s144 = smul.addr %s143, 8
      %s145 = scalar_lea.vmem %s2, %s144
      %s146 = smul.u32 16, %s18
      %p148 = scmp.eq.s32.totalorder %s17, 0
      %p149 = scmp.eq.s32.totalorder %s18, 0
      %p150 = pnand %p148, %p149
      %p151 = pneg %p150
      // Predicated region
      $region29: #{diffusion_forward.1} parent=27 // pred_check
        _
      $region30: #{diffusion_forward.1} parent=27 // pred_check_branch
        %153 = sbr.rel (%p150) target = $region32
      $region31: #{diffusion_forward.1} parent=27 // pred_region
        %v154 = vld [vmem:[%s1] sm:$0xf]
        %v155 = vld [vmem:[%s1 + $0x4] sm:$0xf]
        %v156 = vld [vmem:[%s1 + $0x8] sm:$0xf]
        %v157 = vld [vmem:[%s1 + $0xc] sm:$0xf]
        %v158 = vld [vmem:[%s1 + $0x10] sm:$0xf]
        %v159 = vld [vmem:[%s1 + $0x14] sm:$0xf]
        %v160 = vld [vmem:[%s1 + $0x18] sm:$0xf]
        %v161 = vld [vmem:[%s1 + $0x1c] sm:$0xf]
        %v162 = vld [vmem:[%s1 + $0x20] sm:$0xf]
        %v163 = vld [vmem:[%s1 + $0x24] sm:$0xf]
        %v164 = vld [vmem:[%s1 + $0x28] sm:$0xf]
        %v165 = vld [vmem:[%s1 + $0x2c] sm:$0xf]
        %v166 = vld [vmem:[%s1 + $0x30] sm:$0xf]
        %v167 = vld [vmem:[%s1 + $0x34] sm:$0xf]
        %v168 = vld [vmem:[%s1 + $0x38] sm:$0xf]
        %v169 = vld [vmem:[%s1 + $0x3c] sm:$0xf]
        %170 = vst [vmem:[#allocation2] sm:$0xf] %v154
        %171 = vst [vmem:[#allocation2 + $0x4] sm:$0xf] %v155
        %172 = vst [vmem:[#allocation2 + $0x8] sm:$0xf] %v156
        %173 = vst [vmem:[#allocation2 + $0xc] sm:$0xf] %v157
        %174 = vst [vmem:[#allocation2 + $0x10] sm:$0xf] %v158
        %175 = vst [vmem:[#allocation2 + $0x14] sm:$0xf] %v159
        %176 = vst [vmem:[#allocation2 + $0x18] sm:$0xf] %v160
        %177 = vst [vmem:[#allocation2 + $0x1c] sm:$0xf] %v161
        %178 = vst [vmem:[#allocation2 + $0x20] sm:$0xf] %v162
        %179 = vst [vmem:[#allocation2 + $0x24] sm:$0xf] %v163
        %180 = vst [vmem:[#allocation2 + $0x28] sm:$0xf] %v164
        %181 = vst [vmem:[#allocation2 + $0x2c] sm:$0xf] %v165
        %182 = vst [vmem:[#allocation2 + $0x30] sm:$0xf] %v166
        %183 = vst [vmem:[#allocation2 + $0x34] sm:$0xf] %v167
        %184 = vst [vmem:[#allocation2 + $0x38] sm:$0xf] %v168
        %185 = vst [vmem:[#allocation2 + $0x3c] sm:$0xf] %v169
        %v186 = vld [vmem:[%s1 + $0x40] sm:$0xf]
        %v187 = vld [vmem:[%s1 + $0x44] sm:$0xf]
        %v188 = vld [vmem:[%s1 + $0x48] sm:$0xf]
        %v189 = vld [vmem:[%s1 + $0x4c] sm:$0xf]
        %v190 = vld [vmem:[%s1 + $0x50] sm:$0xf]
        %v191 = vld [vmem:[%s1 + $0x54] sm:$0xf]
        %v192 = vld [vmem:[%s1 + $0x58] sm:$0xf]
        %v193 = vld [vmem:[%s1 + $0x5c] sm:$0xf]
        %v194 = vld [vmem:[%s1 + $0x60] sm:$0xf]
        %v195 = vld [vmem:[%s1 + $0x64] sm:$0xf]
        %v196 = vld [vmem:[%s1 + $0x68] sm:$0xf]
        %v197 = vld [vmem:[%s1 + $0x6c] sm:$0xf]
        %v198 = vld [vmem:[%s1 + $0x70] sm:$0xf]
        %v199 = vld [vmem:[%s1 + $0x74] sm:$0xf]
        %v200 = vld [vmem:[%s1 + $0x78] sm:$0xf]
        %v201 = vld [vmem:[%s1 + $0x7c] sm:$0xf]
        %202 = vst [vmem:[#allocation2 + $0x40] sm:$0xf] %v186
        %203 = vst [vmem:[#allocation2 + $0x44] sm:$0xf] %v187
        %204 = vst [vmem:[#allocation2 + $0x48] sm:$0xf] %v188
        %205 = vst [vmem:[#allocation2 + $0x4c] sm:$0xf] %v189
        %206 = vst [vmem:[#allocation2 + $0x50] sm:$0xf] %v190
        %207 = vst [vmem:[#allocation2 + $0x54] sm:$0xf] %v191
        %208 = vst [vmem:[#allocation2 + $0x58] sm:$0xf] %v192
        %209 = vst [vmem:[#allocation2 + $0x5c] sm:$0xf] %v193
        %210 = vst [vmem:[#allocation2 + $0x60] sm:$0xf] %v194
        %211 = vst [vmem:[#allocation2 + $0x64] sm:$0xf] %v195
        %212 = vst [vmem:[#allocation2 + $0x68] sm:$0xf] %v196
        %213 = vst [vmem:[#allocation2 + $0x6c] sm:$0xf] %v197
        %214 = vst [vmem:[#allocation2 + $0x70] sm:$0xf] %v198
        %215 = vst [vmem:[#allocation2 + $0x74] sm:$0xf] %v199
        %216 = vst [vmem:[#allocation2 + $0x78] sm:$0xf] %v200
        %217 = vst [vmem:[#allocation2 + $0x7c] sm:$0xf] %v201
      $region32: #{diffusion_forward.1} parent=27 // pred_fallthru
        _
      %p218 = scmp.lt.s32.totalorder %s17, 0
      %s219 = ssub.s32 0, %s17
      %s220 = scalar_select %p218, %s219, %s17
      %s221 = sand.u32 %s220, 1
      %s222 = ssub.s32 0, %s221
      %s223 = scalar_select %p218, %s222, %s221
      %p224 = scmp.ne.s32.totalorder %s223, 0
      %p225 = scmp.lt.s32.totalorder %s223, 0
      %p226 = pnand %p225, %p224
      %p227 = pneg %p226
      %s228 = sadd.s32 %s223, 2
      %s229 = scalar_select %p227, %s228, %s223
      %s230 = smul.u32 %s229, 256
      %s231 = sadd.s32 %s17, 1
      %p232 = scmp.lt.s32.totalorder %s231, 0
      %s233 = ssub.s32 0, %s231
      %s234 = scalar_select %p232, %s233, %s231
      %s235 = sand.u32 %s234, 1
      %s236 = ssub.s32 0, %s235
      %s237 = scalar_select %p232, %s236, %s235
      %p238 = scmp.ne.s32.totalorder %s237, 0
      %p239 = scmp.lt.s32.totalorder %s237, 0
      %p240 = pnand %p239, %p238
      %p241 = pneg %p240
      %s242 = sadd.s32 %s237, 2
      %s243 = scalar_select %p241, %s242, %s237
      %s244 = smul.u32 %s243, 256
      %s245 = smul.u32 %s18, 128
      %s246 = sshra.s32 %s245, 3
      %s247 = sand.u32 %s245, 7
      %s248 = smul.u32 %s246, 2
      %s249 = smul.addr %s248, 4
      %s250 = scalar_lea.vmem %s0, %s249
      %v251 = vld [vmem:[%s250] sm:$0xff]
      %v252 = vld [vmem:[%s250 + $0x8] sm:$0xff]
      %v253 = vld [vmem:[%s250 + $0x10] sm:$0xff]
      %v254 = vld [vmem:[%s250 + $0x18] sm:$0xff]
      %v255 = vld [vmem:[%s250 + $0x20] sm:$0xff]
      %v256 = vld [vmem:[%s250 + $0x28] sm:$0xff]
      %v257 = vld [vmem:[%s250 + $0x30] sm:$0xff]
      %v258 = vld [vmem:[%s250 + $0x38] sm:$0xff]
      %v259 = vld [vmem:[%s250 + $0x40] sm:$0xff]
      %v260 = vld [vmem:[%s250 + $0x48] sm:$0xff]
      %v261 = vld [vmem:[%s250 + $0x50] sm:$0xff]
      %v262 = vld [vmem:[%s250 + $0x58] sm:$0xff]
      %v263 = vld [vmem:[%s250 + $0x60] sm:$0xff]
      %v264 = vld [vmem:[%s250 + $0x68] sm:$0xff]
      %v265 = vld [vmem:[%s250 + $0x70] sm:$0xff]
      %v266 = vld [vmem:[%s250 + $0x78] sm:$0xff]
      %s267 = sshra.s32 %s230, 3
      %s268 = sand.u32 %s230, 7
      %s269 = smul.addr %s267, 4
      %s270 = scalar_lea.vmem [#allocation2], %s269
      %v271 = vld [vmem:[%s270] sm:$0xf]
      %v272 = vld [vmem:[%s270 + $0x4] sm:$0xf]
      %v273 = vld [vmem:[%s270 + $0x8] sm:$0xf]
      %v274 = vld [vmem:[%s270 + $0xc] sm:$0xf]
      %v275 = vld [vmem:[%s270 + $0x10] sm:$0xf]
      %v276 = vld [vmem:[%s270 + $0x14] sm:$0xf]
      %v277 = vld [vmem:[%s270 + $0x18] sm:$0xf]
      %v278 = vld [vmem:[%s270 + $0x1c] sm:$0xf]
      %v279 = vld [vmem:[%s270 + $0x20] sm:$0xf]
      %v280 = vld [vmem:[%s270 + $0x24] sm:$0xf]
      %v281 = vld [vmem:[%s270 + $0x28] sm:$0xf]
      %v282 = vld [vmem:[%s270 + $0x2c] sm:$0xf]
      %v283 = vld [vmem:[%s270 + $0x30] sm:$0xf]
      %v284 = vld [vmem:[%s270 + $0x34] sm:$0xf]
      %v285 = vld [vmem:[%s270 + $0x38] sm:$0xf]
      %v286 = vld [vmem:[%s270 + $0x3c] sm:$0xf]
      %v287 = vld [vmem:[%s270 + $0x40] sm:$0xf]
      %v288 = vld [vmem:[%s270 + $0x44] sm:$0xf]
      %v289 = vld [vmem:[%s270 + $0x48] sm:$0xf]
      %v290 = vld [vmem:[%s270 + $0x4c] sm:$0xf]
      %v291 = vld [vmem:[%s270 + $0x50] sm:$0xf]
      %v292 = vld [vmem:[%s270 + $0x54] sm:$0xf]
      %v293 = vld [vmem:[%s270 + $0x58] sm:$0xf]
      %v294 = vld [vmem:[%s270 + $0x5c] sm:$0xf]
      %v295 = vld [vmem:[%s270 + $0x60] sm:$0xf]
      %v296 = vld [vmem:[%s270 + $0x64] sm:$0xf]
      %v297 = vld [vmem:[%s270 + $0x68] sm:$0xf]
      %v298 = vld [vmem:[%s270 + $0x6c] sm:$0xf]
      %v299 = vld [vmem:[%s270 + $0x70] sm:$0xf]
      %v300 = vld [vmem:[%s270 + $0x74] sm:$0xf]
      %v301 = vld [vmem:[%s270 + $0x78] sm:$0xf]
      %v302 = vld [vmem:[%s270 + $0x7c] sm:$0xf]
      %v319 = vunpack.c.l.b16 %v251
      %v320 = vunpack.c.h.b16 %v251
      %v321 = vunpack.c.l.b16 %v252
      %v322 = vunpack.c.h.b16 %v252
      %v323 = vunpack.c.l.b16 %v253
      %v324 = vunpack.c.h.b16 %v253
      %v325 = vunpack.c.l.b16 %v254
      %v326 = vunpack.c.h.b16 %v254
      %v327 = vunpack.c.l.b16 %v255
      %v328 = vunpack.c.h.b16 %v255
      %v329 = vunpack.c.l.b16 %v256
      %v330 = vunpack.c.h.b16 %v256
      %v331 = vunpack.c.l.b16 %v257
      %v332 = vunpack.c.h.b16 %v257
      %v333 = vunpack.c.l.b16 %v258
      %v334 = vunpack.c.h.b16 %v258
      %v335 = vunpack.c.l.b16 %v259
      %v336 = vunpack.c.h.b16 %v259
      %v337 = vunpack.c.l.b16 %v260
      %v338 = vunpack.c.h.b16 %v260
      %v339 = vunpack.c.l.b16 %v261
      %v340 = vunpack.c.h.b16 %v261
      %v341 = vunpack.c.l.b16 %v262
      %v342 = vunpack.c.h.b16 %v262
      %v343 = vunpack.c.l.b16 %v263
      %v344 = vunpack.c.h.b16 %v263
      %v345 = vunpack.c.l.b16 %v264
      %v346 = vunpack.c.h.b16 %v264
      %v347 = vunpack.c.l.b16 %v265
      %v348 = vunpack.c.h.b16 %v265
      %v349 = vunpack.c.l.b16 %v266
      %v350 = vunpack.c.h.b16 %v266
      %v351 = vpack.c.b16 %v321, %v319
      %v352 = vpack.c.b16 %v322, %v320
      %v353 = vpack.c.b16 %v325, %v323
      %v354 = vpack.c.b16 %v326, %v324
      %v355 = vpack.c.b16 %v329, %v327
      %v356 = vpack.c.b16 %v330, %v328
      %v357 = vpack.c.b16 %v333, %v331
      %v358 = vpack.c.b16 %v334, %v332
      %v359 = vpack.c.b16 %v337, %v335
      %v360 = vpack.c.b16 %v338, %v336
      %v361 = vpack.c.b16 %v341, %v339
      %v362 = vpack.c.b16 %v342, %v340
      %v363 = vpack.c.b16 %v345, %v343
      %v364 = vpack.c.b16 %v346, %v344
      %v365 = vpack.c.b16 %v349, %v347
      %v366 = vpack.c.b16 %v350, %v348
      %v415 = vunpack.c.l.b16 %v271
      %v416 = vunpack.c.l.b16 %v272
      %v417 = vunpack.c.l.b16 %v273
      %v418 = vunpack.c.l.b16 %v274
      %v419 = vunpack.c.l.b16 %v275
      %v420 = vunpack.c.l.b16 %v276
      %v421 = vunpack.c.l.b16 %v277
      %v422 = vunpack.c.l.b16 %v278
      %v423 = vunpack.c.l.b16 %v279
      %v424 = vunpack.c.l.b16 %v280
      %v425 = vunpack.c.l.b16 %v281
      %v426 = vunpack.c.l.b16 %v282
      %v427 = vunpack.c.l.b16 %v283
      %v428 = vunpack.c.l.b16 %v284
      %v429 = vunpack.c.l.b16 %v285
      %v430 = vunpack.c.l.b16 %v286
      %v431 = vunpack.c.l.b16 %v287
      %v432 = vunpack.c.l.b16 %v288
      %v433 = vunpack.c.l.b16 %v289
      %v434 = vunpack.c.l.b16 %v290
      %v435 = vunpack.c.l.b16 %v291
      %v436 = vunpack.c.l.b16 %v292
      %v437 = vunpack.c.l.b16 %v293
      %v438 = vunpack.c.l.b16 %v294
      %v439 = vunpack.c.l.b16 %v295
      %v440 = vunpack.c.l.b16 %v296
      %v441 = vunpack.c.l.b16 %v297
      %v442 = vunpack.c.l.b16 %v298
      %v443 = vunpack.c.l.b16 %v299
      %v444 = vunpack.c.l.b16 %v300
      %v445 = vunpack.c.l.b16 %v301
      %v446 = vunpack.c.l.b16 %v302
      %v447 = vpack.c.b16 %v416, %v415
      %v448 = vpack.c.b16 %v418, %v417
      %v449 = vpack.c.b16 %v420, %v419
      %v450 = vpack.c.b16 %v422, %v421
      %v451 = vpack.c.b16 %v424, %v423
      %v452 = vpack.c.b16 %v426, %v425
      %v453 = vpack.c.b16 %v428, %v427
      %v454 = vpack.c.b16 %v430, %v429
      %v455 = vpack.c.b16 %v432, %v431
      %v456 = vpack.c.b16 %v434, %v433
      %v457 = vpack.c.b16 %v436, %v435
      %v458 = vpack.c.b16 %v438, %v437
      %v459 = vpack.c.b16 %v440, %v439
      %v460 = vpack.c.b16 %v442, %v441
      %v461 = vpack.c.b16 %v444, %v443
      %v462 = vpack.c.b16 %v446, %v445
      %479 = vmatprep.subr.bf16.mxu0 0
      %480 = vmatpush1.bf16.msra.mxu0 %v454
      %481 = vmatprep.subr.bf16.mxu0 0
      %482 = vmatpush1.bf16.msra.mxu0 %v453
      %483 = vmatprep.subr.bf16.mxu0 0
      %484 = vmatpush1.bf16.msra.mxu0 %v452
      %485 = vmatprep.subr.bf16.mxu0 0
      %486 = vmatpush1.bf16.msra.mxu0 %v451
      %487 = vmatprep.subr.bf16.mxu0 0
      %488 = vmatpush1.bf16.msra.mxu0 %v450
      %489 = vmatprep.subr.bf16.mxu0 0
      %490 = vmatpush1.bf16.msra.mxu0 %v449
      %491 = vmatprep.subr.bf16.mxu0 0
      %492 = vmatpush1.bf16.msra.mxu0 %v448
      %493 = vmatprep.subr.bf16.mxu0 0
      %494 = vmatpush1.bf16.msra.mxu0 %v447
      %495 = vmatprep.subr.bf16.mxu0 0
      %496 = vmatpush2.bf16.msra.mxu0 %v462
      %497 = vmatprep.subr.bf16.mxu0 0
      %498 = vmatpush2.bf16.msra.mxu0 %v461
      %499 = vmatprep.subr.bf16.mxu0 0
      %500 = vmatpush2.bf16.msra.mxu0 %v460
      %501 = vmatprep.subr.bf16.mxu0 0
      %502 = vmatpush2.bf16.msra.mxu0 %v459
      %503 = vmatprep.subr.bf16.mxu0 0
      %504 = vmatpush2.bf16.msra.mxu0 %v458
      %505 = vmatprep.subr.bf16.mxu0 0
      %506 = vmatpush2.bf16.msra.mxu0 %v457
      %507 = vmatprep.subr.bf16.mxu0 0
      %508 = vmatpush2.bf16.msra.mxu0 %v456
      %509 = vmatprep.subr.bf16.mxu0 0
      %510 = vmatpush2.bf16.msra.mxu0 %v455
      %511 = vmatprep.mubr.bf16.mxu0 %v352
      %512 = vmatmul.mubr.bf16.gmra.mxu0 %v351
      %v513 = vpop.f32.mrf.mxu0
      %v514 = vadd.f32 0.0, %v513
      %v515 = vpop.f32.mrf.mxu0
      %v516 = vpop.f32.mrf.mxu0
      %v517 = vadd.f32 0.0, %v516
      %v518 = vpop.f32.mrf.mxu0
      %519 = vmatprep.mubr.bf16.mxu0 %v354
      %520 = vmatmul.mubr.bf16.gmra.mxu0 %v353
      %v521 = vpop.f32.mrf.mxu0
      %v522 = vadd.f32 0.0, %v521
      %v523 = vpop.f32.mrf.mxu0
      %v524 = vpop.f32.mrf.mxu0
      %v525 = vadd.f32 0.0, %v524
      %v526 = vpop.f32.mrf.mxu0
      %527 = vmatprep.mubr.bf16.mxu0 %v356
      %528 = vmatmul.mubr.bf16.gmra.mxu0 %v355
      %v529 = vpop.f32.mrf.mxu0
      %v530 = vadd.f32 0.0, %v529
      %v531 = vpop.f32.mrf.mxu0
      %v532 = vpop.f32.mrf.mxu0
      %v533 = vadd.f32 0.0, %v532
      %v534 = vpop.f32.mrf.mxu0
      %535 = vmatprep.mubr.bf16.mxu0 %v358
      %536 = vmatmul.mubr.bf16.gmra.mxu0 %v357
      %v537 = vpop.f32.mrf.mxu0
      %v538 = vadd.f32 0.0, %v537
      %v539 = vpop.f32.mrf.mxu0
      %v540 = vpop.f32.mrf.mxu0
      %v541 = vadd.f32 0.0, %v540
      %v542 = vpop.f32.mrf.mxu0
      %543 = vmatprep.mubr.bf16.mxu0 %v360
      %544 = vmatmul.mubr.bf16.gmra.mxu0 %v359
      %v545 = vpop.f32.mrf.mxu0
      %v546 = vadd.f32 0.0, %v545
      %v547 = vpop.f32.mrf.mxu0
      %v548 = vpop.f32.mrf.mxu0
      %v549 = vadd.f32 0.0, %v548
      %v550 = vpop.f32.mrf.mxu0
      %551 = vmatprep.mubr.bf16.mxu0 %v362
      %552 = vmatmul.mubr.bf16.gmra.mxu0 %v361
      %v553 = vpop.f32.mrf.mxu0
      %v554 = vadd.f32 0.0, %v553
      %v555 = vpop.f32.mrf.mxu0
      %v556 = vpop.f32.mrf.mxu0
      %v557 = vadd.f32 0.0, %v556
      %v558 = vpop.f32.mrf.mxu0
      %559 = vmatprep.mubr.bf16.mxu0 %v364
      %560 = vmatmul.mubr.bf16.gmra.mxu0 %v363
      %v561 = vpop.f32.mrf.mxu0
      %v562 = vadd.f32 0.0, %v561
      %v563 = vpop.f32.mrf.mxu0
      %v564 = vpop.f32.mrf.mxu0
      %v565 = vadd.f32 0.0, %v564
      %v566 = vpop.f32.mrf.mxu0
      %567 = vmatprep.mubr.bf16.mxu0 %v366
      %568 = vmatmul.mubr.bf16.gmra.mxu0 %v365
      %v569 = vpop.f32.mrf.mxu0
      %v570 = vadd.f32 0.0, %v569
      %v571 = vpop.f32.mrf.mxu0
      %v572 = vpop.f32.mrf.mxu0
      %v573 = vadd.f32 0.0, %v572
      %v574 = vpop.f32.mrf.mxu0
      %575 = vdwg.mxu0
      %v576 = vpack.c.bf16 %v517, %v514
      %v577 = vpack.c.bf16 %v525, %v522
      %v578 = vpack.c.bf16 %v533, %v530
      %v579 = vpack.c.bf16 %v541, %v538
      %v580 = vpack.c.bf16 %v549, %v546
      %v581 = vpack.c.bf16 %v557, %v554
      %v582 = vpack.c.bf16 %v565, %v562
      %v583 = vpack.c.bf16 %v573, %v570
      %s584 = sadd.s32 %s244, %s245
      %v593 = vunpack.c.l.b16 %v576
      %v594 = vunpack.c.h.b16 %v576
      %v595 = vunpack.c.l.b16 %v577
      %v596 = vunpack.c.h.b16 %v577
      %v597 = vunpack.c.l.b16 %v578
      %v598 = vunpack.c.h.b16 %v578
      %v599 = vunpack.c.l.b16 %v579
      %v600 = vunpack.c.h.b16 %v579
      %v601 = vunpack.c.l.b16 %v580
      %v602 = vunpack.c.h.b16 %v580
      %v603 = vunpack.c.l.b16 %v581
      %v604 = vunpack.c.h.b16 %v581
      %v605 = vunpack.c.l.b16 %v582
      %v606 = vunpack.c.h.b16 %v582
      %v607 = vunpack.c.l.b16 %v583
      %v608 = vunpack.c.h.b16 %v583
      %v609 = vpack.c.b16 %v593, %v593
      %v610 = vpack.c.b16 %v594, %v594
      %v611 = vpack.c.b16 %v595, %v595
      %v612 = vpack.c.b16 %v596, %v596
      %v613 = vpack.c.b16 %v597, %v597
      %v614 = vpack.c.b16 %v598, %v598
      %v615 = vpack.c.b16 %v599, %v599
      %v616 = vpack.c.b16 %v600, %v600
      %v617 = vpack.c.b16 %v601, %v601
      %v618 = vpack.c.b16 %v602, %v602
      %v619 = vpack.c.b16 %v603, %v603
      %v620 = vpack.c.b16 %v604, %v604
      %v621 = vpack.c.b16 %v605, %v605
      %v622 = vpack.c.b16 %v606, %v606
      %v623 = vpack.c.b16 %v607, %v607
      %v624 = vpack.c.b16 %v608, %v608
      %s641 = sshra.s32 %s584, 3
      %s642 = sand.u32 %s584, 7
      %s643 = smul.addr %s641, 4
      %s644 = scalar_lea.vmem [#allocation2], %s643
      %645 = vst [vmem:[%s644] sm:$0xf] %v609
      %646 = vst [vmem:[%s644 + $0x4] sm:$0xf] %v610
      %647 = vst [vmem:[%s644 + $0x8] sm:$0xf] %v611
      %648 = vst [vmem:[%s644 + $0xc] sm:$0xf] %v612
      %649 = vst [vmem:[%s644 + $0x10] sm:$0xf] %v613
      %650 = vst [vmem:[%s644 + $0x14] sm:$0xf] %v614
      %651 = vst [vmem:[%s644 + $0x18] sm:$0xf] %v615
      %652 = vst [vmem:[%s644 + $0x1c] sm:$0xf] %v616
      %653 = vst [vmem:[%s644 + $0x20] sm:$0xf] %v617
      %654 = vst [vmem:[%s644 + $0x24] sm:$0xf] %v618
      %655 = vst [vmem:[%s644 + $0x28] sm:$0xf] %v619
      %656 = vst [vmem:[%s644 + $0x2c] sm:$0xf] %v620
      %657 = vst [vmem:[%s644 + $0x30] sm:$0xf] %v621
      %658 = vst [vmem:[%s644 + $0x34] sm:$0xf] %v622
      %659 = vst [vmem:[%s644 + $0x38] sm:$0xf] %v623
      %660 = vst [vmem:[%s644 + $0x3c] sm:$0xf] %v624
      %661 = vst [vmem:[%s145] sm:$0xff] %v514
      %662 = vst [vmem:[%s145 + $0x8] sm:$0xff] %v517
      %663 = vst [vmem:[%s145 + $0x10] sm:$0xff] %v522
      %664 = vst [vmem:[%s145 + $0x18] sm:$0xff] %v525
      %665 = vst [vmem:[%s145 + $0x20] sm:$0xff] %v530
      %666 = vst [vmem:[%s145 + $0x28] sm:$0xff] %v533
      %667 = vst [vmem:[%s145 + $0x30] sm:$0xff] %v538
      %668 = vst [vmem:[%s145 + $0x38] sm:$0xff] %v541
      %669 = vst [vmem:[%s145 + $0x40] sm:$0xff] %v546
      %670 = vst [vmem:[%s145 + $0x48] sm:$0xff] %v549
      %671 = vst [vmem:[%s145 + $0x50] sm:$0xff] %v554
      %672 = vst [vmem:[%s145 + $0x58] sm:$0xff] %v557
      %673 = vst [vmem:[%s145 + $0x60] sm:$0xff] %v562
      %674 = vst [vmem:[%s145 + $0x68] sm:$0xff] %v565
      %675 = vst [vmem:[%s145 + $0x70] sm:$0xff] %v570
      %676 = vst [vmem:[%s145 + $0x78] sm:$0xff] %v573
      %s677 = smul.u32 16, %s18
      %p678 = scmp.lt.s32.totalorder %s17, 2
      %s679 = scalar_select %p678, %s17, 2
      %p680 = scmp.lt.s32.totalorder %s677, 31
      %s681 = scalar_select %p680, %s677, 31
      %s682 = smul.addr %s679, 32
      %s683 = sadd.s32 %s681, %s682
      %s684 = smul.addr %s683, 8
      %s685 = scalar_lea.vmem %s2, %s684
      // Predicated region
      $region33: #{diffusion_forward.1} parent=27 // pred_check
        %p686 = pneg %p87
      $region34: #{diffusion_forward.1} parent=27 // pred_check_branch
        %688 = sbr.rel (%p686) target = $region36
      $region35: #{diffusion_forward.1} parent=27 // pred_region
        %s689 = smul.u32 16, %s18
      $region36: #{diffusion_forward.1} parent=27 // pred_fallthru
        _
    $region28: #{diffusion_forward.1} parent=5 // pred_fallthru
      _
    %p690 = scmp.le.s32.totalorder 2, %s8
    // Predicated region
    $region37: #{diffusion_forward.1} parent=5 // pred_check
      %p691 = pneg %p690
    $region38: #{diffusion_forward.1} parent=5 // pred_check_branch
      %693 = sbr.rel (%p691) target = $region40
    $region39: #{diffusion_forward.1} parent=5 // pred_region
      %s694 = ssub.s32 %s8, 2
      // Predicated region
      $region41: #{diffusion_forward.1} parent=39 // pred_check
        %p695 = pneg %p93
      $region42: #{diffusion_forward.1} parent=39 // pred_check_branch
        %697 = sbr.rel (%p695) target = $region44
      $region43: #{diffusion_forward.1} parent=39 // pred_region
        %s698 = smul.u32 16, %s20
        %p699 = scmp.lt.s32.totalorder %s19, 2
        %s700 = scalar_select %p699, %s19, 2
        %p701 = scmp.lt.s32.totalorder %s698, 31
        %s702 = scalar_select %p701, %s698, 31
        %s703 = smul.addr %s700, 32
        %s704 = sadd.s32 %s702, %s703
        %s705 = smul.addr %s704, 8
        %s706 = scalar_lea.vmem %s2, %s705
      $region44: #{diffusion_forward.1} parent=39 // pred_fallthru
        _
    $region40: #{diffusion_forward.1} parent=5 // pred_fallthru
      _
  $region6: #{diffusion_forward.1} parent=0 // loop_footer
    %s12 = sadd.s32 1, %s8
  $region7: #{diffusion_forward.1} parent=0 // loop_footer_branch
    %7 = sbr.rel target = $region3
  $region8: #{diffusion_forward.1} parent=0 // loop_exit
    _

</llo_original>
